<compile_context>
chip_gen: v6e
topology: v6e:2x2x1
jax: 0.10.0
libtpu: 0.0.40
codegen_flags: <defaults>
</compile_context>

<pallas_src>
import functools

import jax
import jax.numpy as jnp
from jax import lax
from jax.experimental import pallas as pl
from jax.experimental.pallas import tpu as pltpu


LANES = 128
SUBLANES = 8
CHUNK_ROWS = 1024  # compute-chunk rows inside a block (bounds live intermediates)


def _round_up(x, m):
    return ((x + m - 1) // m) * m


def _chip_config():
    """Return (block_rows_target, num_cores) tuned per TPU generation."""
    try:
        kind = jax.devices()[0].device_kind.lower()
    except Exception:  # pragma: no cover - non-TPU fallback
        kind = ""
    if "v7" in kind or "7x" in kind:
        # 2 TensorCores per chip; 8192-row f32 blocks = 24 MiB double-buffered
        # input, inside the 32 MiB scoped default (64 MiB physical VMEM).
        return 8192, 2
    if "v6" in kind:
        return 8192, 1
    if "v5" in kind:
        return 4096, 1   # 16 MiB scoped-VMEM default on v5e
    return 4096, 1       # conservative: fits every generation's default


def _regloss_kernel(pred_ref, mask_ref, base_ref, acc_ref, *,
                    block_rows, chunk_rows, n_chunks, rows, total_blocks,
                    core1_off, overlap, has_partial_edge):
    c = pl.program_id(0)          # "core" (parallel) axis
    i = pl.program_id(1)          # reduction (arbitrary) axis
    blk = c * core1_off + i       # logical block index

    @pl.when(i == 0)
    def _init():
        acc_ref[...] = jnp.zeros_like(acc_ref)

    def _chunk(p_raw, m_raw, b_raw, row_start, masked):
        # Upcast narrow native dtypes to f32 only inside the tile.
        p = p_raw.astype(jnp.float32)
        b = b_raw.astype(jnp.float32)
        m = m_raw.astype(jnp.float32)
        d = p - b
        num_t = d * d * m
        den_t = m
        if masked:
            # Select (not multiply): OOB rows hold unspecified data that may
            # be Inf/NaN; a true select keeps them from propagating.
            row_ids = lax.broadcasted_iota(jnp.int32, num_t.shape, 0)
            valid = (row_ids + row_start) < rows
            num_t = jnp.where(valid, num_t, 0.0)
            den_t = jnp.where(valid, den_t, 0.0)
        g = num_t.shape[0] // SUBLANES
        # Pure-VPU accumulation into the resident (8,128) output bands.
        acc_ref[0:SUBLANES, :] += jnp.sum(
            num_t.reshape(g, SUBLANES, LANES), axis=0)
        acc_ref[SUBLANES:2 * SUBLANES, :] += jnp.sum(
            den_t.reshape(g, SUBLANES, LANES), axis=0)

    def _block(masked):
        if n_chunks == 1:
            _chunk(pred_ref[...], mask_ref[...], base_ref[...],
                   blk * block_rows, masked)
        else:
            @pl.loop(0, n_chunks)
            def _(j):
                r0 = pl.multiple_of(j * chunk_rows, chunk_rows)
                sl = pl.ds(r0, chunk_rows)
                _chunk(pred_ref[sl, :], mask_ref[sl, :], base_ref[sl, :],
                       blk * block_rows + r0, masked)

    # On the 2-core split with an odd block count, core 1's first `overlap`
    # steps duplicate blocks already handled by core 0: skip their compute.
    active = None
    if overlap > 0:
        active = jnp.logical_or(c == 0, i >= overlap)

    if has_partial_edge:
        # Only the last logical block can overrun `rows`: gate the masking
        # machinery so every other step runs the lean path.
        is_edge = blk == (total_blocks - 1)
        fast_cond = jnp.logical_not(is_edge)
        edge_cond = is_edge
        if active is not None:
            fast_cond = jnp.logical_and(active, fast_cond)
            edge_cond = jnp.logical_and(active, edge_cond)
        pl.when(fast_cond)(lambda: _block(False))
        pl.when(edge_cond)(lambda: _block(True))
    else:
        if active is not None:
            pl.when(active)(lambda: _block(False))
        else:
            _block(False)


def reg_loss(predictions, mask, base_prices, *, block_rows_target=None):
    """Pallas implementation of RegLoss.forward (returns f32 scalar)."""
    pred = jnp.ravel(predictions)
    base = jnp.ravel(base_prices)
    msk = jnp.ravel(mask)
    n = pred.shape[0]

    target, num_cores = _chip_config()
    if block_rows_target is not None:
        target = block_rows_target
    target = max(32, _round_up(target, 32))

    # Lane alignment: view the flat streams as (rows, 128).  Only when n is
    # not a multiple of 128 do we pad, and pads are zeros (mask pad == 0
    # contributes nothing to either sum -> exact).
    # TODO(synk): copy-free ragged path (lane-level validity mask on 1-D blocks).
    if n % LANES != 0:
        pad = (0, LANES - n % LANES)
        pred = jnp.pad(pred, pad)
        base = jnp.pad(base, pad)
        msk = jnp.pad(msk, pad)
    rows = pred.shape[0] // LANES
    pred2 = pred.reshape(rows, LANES)
    base2 = base.reshape(rows, LANES)
    mask2 = msk.reshape(rows, LANES)

    # Block rows: multiple of 32 (covers f32/bf16/int8/bool sublane tiling);
    # rounded to a CHUNK_ROWS multiple when large so compute can be chunked.
    block_rows = min(target, _round_up(rows, 32))
    if block_rows > CHUNK_ROWS:
        block_rows = min(target, _round_up(block_rows, CHUNK_ROWS))
    total_blocks = -(-rows // block_rows)
    if total_blocks < 2:
        num_cores = 1
    steps = -(-total_blocks // num_cores)
    core1_off = total_blocks - steps            # core 1's first block (in-bounds)
    overlap = num_cores * steps - total_blocks  # 0 or 1 duplicated block
    has_partial_edge = (rows % block_rows) != 0

    if block_rows % CHUNK_ROWS == 0 and block_rows > CHUNK_ROWS:
        chunk_rows, n_chunks = CHUNK_ROWS, block_rows // CHUNK_ROWS
    else:
        chunk_rows, n_chunks = block_rows, 1

    kernel = functools.partial(
        _regloss_kernel,
        block_rows=block_rows, chunk_rows=chunk_rows, n_chunks=n_chunks,
        rows=rows, total_blocks=total_blocks, core1_off=core1_off,
        overlap=overlap, has_partial_edge=has_partial_edge)

    in_spec = pl.BlockSpec((block_rows, LANES),
                           lambda c, i: (c * core1_off + i, 0))
    out_spec = pl.BlockSpec((2 * SUBLANES, LANES), lambda c, i: (c, 0))

    itemsizes = [jnp.dtype(a.dtype).itemsize for a in (pred2, mask2, base2)]
    in_bytes = sum(int(a.size) * s for a, s in zip((pred2, mask2, base2), itemsizes))
    block_bytes = block_rows * LANES * sum(itemsizes)
    # Double-buffered input blocks + intermediate/scratch headroom; capped
    # well under the smallest physical VMEM (64 MiB on v7x).
    vmem_limit = int(min(max(2 * block_bytes + (16 << 20), 24 << 20), 56 << 20))

    acc = pl.pallas_call(
        kernel,
        out_shape=jax.ShapeDtypeStruct((num_cores * 2 * SUBLANES, LANES),
                                       jnp.float32),
        grid_spec=pltpu.PrefetchScalarGridSpec(
            num_scalar_prefetch=0,
            grid=(num_cores, steps),
            in_specs=[in_spec, in_spec, in_spec],
            out_specs=out_spec),
        compiler_params=pltpu.CompilerParams(
            # TODO(synk): on v7x verify "parallel" shards the leading axis
            # across both TensorCores; switch to pltpu.CORE_PARALLEL if not.
            dimension_semantics=("parallel", "arbitrary"),
            vmem_limit_bytes=vmem_limit),
        cost_estimate=pl.CostEstimate(
            flops=5 * rows * LANES, transcendentals=0,
            bytes_accessed=in_bytes),
    )(pred2, mask2, base2)

    parts = acc.reshape(num_cores, 2, SUBLANES, LANES)
    num = jnp.sum(parts[:, 0])
    den = jnp.sum(parts[:, 1])
    # torch: if reg_loss != 0: reg_loss = reg_loss / sum(mask)
    return jnp.where(num != 0.0, num / den, num)


def reg_loss_ref(predictions, mask, base_prices):
    """Pure-JAX reference for correctness checks."""
    p = predictions.astype(jnp.float32)
    b = base_prices.astype(jnp.float32)
    m = mask.astype(jnp.float32)
    s = jnp.sum((p - b) ** 2 * m)
    return jnp.where(s != 0.0, s / jnp.sum(m), s)


if __name__ == "__main__":
    key = jax.random.PRNGKey(0)
    k1, k2, k3, k4 = jax.random.split(key, 4)

    # Test 1: module's natural small (B, C, H, W) shape, f32.
    shape = (2, 4, 16, 16)
    predictions = jax.random.normal(k1, shape, dtype=jnp.float32)
    base_prices = jax.random.normal(k2, shape, dtype=jnp.float32)
    mask = (jax.random.uniform(k3, shape) > 0.5).astype(jnp.float32)

    out = jax.block_until_ready(reg_loss(predictions, mask, base_prices))
    ref = jax.block_until_ready(reg_loss_ref(predictions, mask, base_prices))
    assert jnp.allclose(out, ref, rtol=1e-5, atol=1e-5), (out, ref)

    # Test 2: native bf16 inputs, ragged element count (pad-to-128 path),
    # forced small block target to exercise multi-block, the gated edge mask,
    # the in-block chunk loop, and (on v7x) the 2-core split with odd blocks.
    s2 = (3, 7, 125, 200)
    ka, kb, kc = jax.random.split(k4, 3)
    p2 = jax.random.normal(ka, s2, dtype=jnp.bfloat16)
    b2 = jax.random.normal(kb, s2, dtype=jnp.bfloat16)
    m2 = (jax.random.uniform(kc, s2) > 0.5).astype(jnp.float32)

    out2 = jax.block_until_ready(reg_loss(p2, m2, b2, block_rows_target=2048))
    ref2 = jax.block_until_ready(reg_loss_ref(p2, m2, b2))
    assert jnp.allclose(out2, ref2, rtol=1e-4, atol=1e-5), (out2, ref2)

    print("KERNEL_OK")
</pallas_src>

<mosaic_0001>
module attributes {stable_mosaic.version = 11 : i64} {
  func.func @_regloss_kernel(%arg0: i32, %arg1: i32, %arg2: memref<32x128xf32, #tpu.memory_space<vmem>>, %arg3: memref<32x128xf32, #tpu.memory_space<vmem>>, %arg4: memref<32x128xf32, #tpu.memory_space<vmem>>, %arg5: memref<16x128xf32, #tpu.memory_space<vmem>>) attributes {dimension_semantics = [#tpu.dimension_semantics<parallel>, #tpu.dimension_semantics<arbitrary>], iteration_bounds = array<i64: 1, 1>, scalar_prefetch = 0 : i64, scratch_operands = 0 : i64, tpu.core_type = #tpu.core_type<tc>, window_params = [{transform_indices = @transform_0, window_bounds = array<i64: 32, 128>}, {transform_indices = @transform_1, window_bounds = array<i64: 32, 128>}, {transform_indices = @transform_2, window_bounds = array<i64: 32, 128>}, {transform_indices = @transform_3, window_bounds = array<i64: 16, 128>}]} {
    %c0_i32 = arith.constant 0 : i32
    %0 = arith.muli %arg0, %c0_i32 : i32
    %1 = arith.addi %0, %arg1 : i32
    %c0_i32_0 = arith.constant 0 : i32
    %2 = arith.cmpi eq, %arg1, %c0_i32_0 : i32
    %3 = arith.extui %2 : i1 to i32
    %c0_i32_1 = arith.constant 0 : i32
    %4 = arith.cmpi ne, %3, %c0_i32_1 : i32
    scf.if %4 {
      %cst = arith.constant 0.000000e+00 : f32
      %11 = vector.broadcast %cst : f32 to vector<16x128xf32>
      %c0 = arith.constant 0 : index
      %c0_5 = arith.constant 0 : index
      %12 = vector.load %arg5[%c0, %c0_5] : memref<16x128xf32, #tpu.memory_space<vmem>>, vector<16x128xf32>
      tpu.vector_store %arg5[%c0, %c0_5], %11 {strides = array<i32>} : memref<16x128xf32, #tpu.memory_space<vmem>>, vector<16x128xf32>,
    } else {
    }
    %c0_i32_2 = arith.constant 0 : i32
    %5 = arith.cmpi eq, %1, %c0_i32_2 : i32
    %true = arith.constant true
    %6 = arith.xori %5, %true : i1
    %7 = arith.extui %6 : i1 to i32
    %c0_i32_3 = arith.constant 0 : i32
    %8 = arith.cmpi ne, %7, %c0_i32_3 : i32
    scf.if %8 {
      %c0 = arith.constant 0 : index
      %c0_5 = arith.constant 0 : index
      %11 = vector.load %arg2[%c0, %c0_5] : memref<32x128xf32, #tpu.memory_space<vmem>>, vector<32x128xf32>
      %c0_6 = arith.constant 0 : index
      %c0_7 = arith.constant 0 : index
      %12 = vector.load %arg3[%c0_6, %c0_7] : memref<32x128xf32, #tpu.memory_space<vmem>>, vector<32x128xf32>
      %c0_8 = arith.constant 0 : index
      %c0_9 = arith.constant 0 : index
      %13 = vector.load %arg4[%c0_8, %c0_9] : memref<32x128xf32, #tpu.memory_space<vmem>>, vector<32x128xf32>
      %14 = arith.subf %11, %13 : vector<32x128xf32>
      %15 = arith.mulf %14, %14 : vector<32x128xf32>
      %16 = arith.mulf %15, %12 : vector<32x128xf32>
      %c0_10 = arith.constant 0 : index
      %c0_11 = arith.constant 0 : index
      %17 = vector.load %arg5[%c0_10, %c0_11] : memref<16x128xf32, #tpu.memory_space<vmem>>, vector<8x128xf32>
      %18 = vector.shape_cast %16 : vector<32x128xf32> to vector<4x8x128xf32>
      %cst = arith.constant dense<0.000000e+00> : vector<8x128xf32>
      %19 = vector.multi_reduction <add>, %18, %cst [0] : vector<4x8x128xf32> to vector<8x128xf32>
      %20 = arith.addf %17, %19 : vector<8x128xf32>
      %c0_12 = arith.constant 0 : index
      %c0_13 = arith.constant 0 : index
      %21 = vector.load %arg5[%c0_12, %c0_13] : memref<16x128xf32, #tpu.memory_space<vmem>>, vector<8x128xf32>
      tpu.vector_store %arg5[%c0_12, %c0_13], %20 {strides = array<i32>} : memref<16x128xf32, #tpu.memory_space<vmem>>, vector<8x128xf32>,
      %c8 = arith.constant 8 : index
      %c0_14 = arith.constant 0 : index
      %22 = vector.load %arg5[%c8, %c0_14] : memref<16x128xf32, #tpu.memory_space<vmem>>, vector<8x128xf32>
      %23 = vector.shape_cast %12 : vector<32x128xf32> to vector<4x8x128xf32>
      %cst_15 = arith.constant dense<0.000000e+00> : vector<8x128xf32>
      %24 = vector.multi_reduction <add>, %23, %cst_15 [0] : vector<4x8x128xf32> to vector<8x128xf32>
      %25 = arith.addf %22, %24 : vector<8x128xf32>
      %c8_16 = arith.constant 8 : index
      %c0_17 = arith.constant 0 : index
      %26 = vector.load %arg5[%c8_16, %c0_17] : memref<16x128xf32, #tpu.memory_space<vmem>>, vector<8x128xf32>
      tpu.vector_store %arg5[%c8_16, %c0_17], %25 {strides = array<i32>} : memref<16x128xf32, #tpu.memory_space<vmem>>, vector<8x128xf32>,
    } else {
    }
    %9 = arith.extui %5 : i1 to i32
    %c0_i32_4 = arith.constant 0 : i32
    %10 = arith.cmpi ne, %9, %c0_i32_4 : i32
    scf.if %10 {
      %c0 = arith.constant 0 : index
      %c0_5 = arith.constant 0 : index
      %11 = vector.load %arg2[%c0, %c0_5] : memref<32x128xf32, #tpu.memory_space<vmem>>, vector<32x128xf32>
      %c0_6 = arith.constant 0 : index
      %c0_7 = arith.constant 0 : index
      %12 = vector.load %arg3[%c0_6, %c0_7] : memref<32x128xf32, #tpu.memory_space<vmem>>, vector<32x128xf32>
      %c0_8 = arith.constant 0 : index
      %c0_9 = arith.constant 0 : index
      %13 = vector.load %arg4[%c0_8, %c0_9] : memref<32x128xf32, #tpu.memory_space<vmem>>, vector<32x128xf32>
      %c32_i32 = arith.constant 32 : i32
      %14 = arith.muli %1, %c32_i32 : i32
      %15 = arith.subf %11, %13 : vector<32x128xf32>
      %16 = arith.mulf %15, %15 : vector<32x128xf32>
      %17 = arith.mulf %16, %12 : vector<32x128xf32>
      %18 = tpu.iota {dimensions = array<i32: 0>} : vector<32x128xi32>
      %19 = vector.broadcast %14 : i32 to vector<32x128xi32>
      %20 = arith.addi %18, %19 : vector<32x128xi32>
      %c16_i32 = arith.constant 16 : i32
      %21 = vector.broadcast %c16_i32 : i32 to vector<32x128xi32>
      %22 = arith.cmpi slt, %20, %21 : vector<32x128xi32>
      %cst = arith.constant 0.000000e+00 : f32
      %23 = vector.broadcast %cst : f32 to vector<32x128xf32>
      %24 = arith.select %22, %17, %23 : vector<32x128xi1>, vector<32x128xf32>
      %cst_10 = arith.constant 0.000000e+00 : f32
      %25 = vector.broadcast %cst_10 : f32 to vector<32x128xf32>
      %26 = arith.select %22, %12, %25 : vector<32x128xi1>, vector<32x128xf32>
      %c0_11 = arith.constant 0 : index
      %c0_12 = arith.constant 0 : index
      %27 = vector.load %arg5[%c0_11, %c0_12] : memref<16x128xf32, #tpu.memory_space<vmem>>, vector<8x128xf32>
      %28 = vector.shape_cast %24 : vector<32x128xf32> to vector<4x8x128xf32>
      %cst_13 = arith.constant dense<0.000000e+00> : vector<8x128xf32>
      %29 = vector.multi_reduction <add>, %28, %cst_13 [0] : vector<4x8x128xf32> to vector<8x128xf32>
      %30 = arith.addf %27, %29 : vector<8x128xf32>
      %c0_14 = arith.constant 0 : index
      %c0_15 = arith.constant 0 : index
      %31 = vector.load %arg5[%c0_14, %c0_15] : memref<16x128xf32, #tpu.memory_space<vmem>>, vector<8x128xf32>
      tpu.vector_store %arg5[%c0_14, %c0_15], %30 {strides = array<i32>} : memref<16x128xf32, #tpu.memory_space<vmem>>, vector<8x128xf32>,
      %c8 = arith.constant 8 : index
      %c0_16 = arith.constant 0 : index
      %32 = vector.load %arg5[%c8, %c0_16] : memref<16x128xf32, #tpu.memory_space<vmem>>, vector<8x128xf32>
      %33 = vector.shape_cast %26 : vector<32x128xf32> to vector<4x8x128xf32>
      %cst_17 = arith.constant dense<0.000000e+00> : vector<8x128xf32>
      %34 = vector.multi_reduction <add>, %33, %cst_17 [0] : vector<4x8x128xf32> to vector<8x128xf32>
      %35 = arith.addf %32, %34 : vector<8x128xf32>
      %c8_18 = arith.constant 8 : index
      %c0_19 = arith.constant 0 : index
      %36 = vector.load %arg5[%c8_18, %c0_19] : memref<16x128xf32, #tpu.memory_space<vmem>>, vector<8x128xf32>
      tpu.vector_store %arg5[%c8_18, %c0_19], %35 {strides = array<i32>} : memref<16x128xf32, #tpu.memory_space<vmem>>, vector<8x128xf32>,
    } else {
    }
    return
  }
  func.func @transform_0(%arg0: i32, %arg1: i32) -> (i32, i32) {
    %c0_i32 = arith.constant 0 : i32
    %0 = arith.muli %arg0, %c0_i32 : i32
    %1 = arith.addi %0, %arg1 : i32
    %c0_i32_0 = arith.constant 0 : i32
    %c0_i32_1 = arith.constant 0 : i32
    return %1, %c0_i32_0 : i32, i32
  }
  func.func @transform_1(%arg0: i32, %arg1: i32) -> (i32, i32) {
    %c0_i32 = arith.constant 0 : i32
    %0 = arith.muli %arg0, %c0_i32 : i32
    %1 = arith.addi %0, %arg1 : i32
    %c0_i32_0 = arith.constant 0 : i32
    %c0_i32_1 = arith.constant 0 : i32
    return %1, %c0_i32_0 : i32, i32
  }
  func.func @transform_2(%arg0: i32, %arg1: i32) -> (i32, i32) {
    %c0_i32 = arith.constant 0 : i32
    %0 = arith.muli %arg0, %c0_i32 : i32
    %1 = arith.addi %0, %arg1 : i32
    %c0_i32_0 = arith.constant 0 : i32
    %c0_i32_1 = arith.constant 0 : i32
    return %1, %c0_i32_0 : i32, i32
  }
  func.func @transform_3(%arg0: i32, %arg1: i32) -> (i32, i32) {
    %c0_i32 = arith.constant 0 : i32
    %c0_i32_0 = arith.constant 0 : i32
    return %arg0, %c0_i32 : i32, i32
  }
}

</mosaic_0001>

<llo_original>
// kernel: tpu_custom_call.1
$region0: #{tpu_custom_call.1}
  #allocation0 [shape = 'u32[]', space=smem, size = 0x4, offset = 0x4, fixed_abs, tag = 'smem constant byte address 0x4 - core index']
  #allocation1 [shape = 'u32[144,128]{1,0:T(1,128)}', space=vmem, size = 0x12000, scoped, tag = 'internal scratch']
  %s0 = inlined_call_operand.hbm [shape: f32[16,128], index: 0, kind: input, shape index: {}]
  %s1 = inlined_call_operand.hbm [shape: f32[16,128], index: 1, kind: input, shape index: {}]
  %s2 = inlined_call_operand.hbm [shape: f32[16,128], index: 2, kind: input, shape index: {}]
  %s3 = inlined_call_operand.hbm [shape: f32[16,128], index: 3, kind: output, shape index: {}]
  %s4 = sld [smem:[#allocation0]]
  $region46: #{tpu_custom_call.1} parent=0
    _
  %s6 = ssub.s32 1, %s4
  %s7 = scalar_select 0, %s6, %s4
  $region1: #{tpu_custom_call.1} parent=0
    #allocation2 [shape = 'u8[16384]{0}', space=vmem, size = 0x4000, scoped, tag = 'input window, operand 0, single buffered']
    #allocation3 [shape = 's32[1]{0}', space=sflag, size = 0x4, scoped, tag = 'scoped memory for tpu_custom_call.1']
    #allocation4 [shape = 's32[1]{0}', space=sflag, size = 0x4, scoped, tag = 'scoped memory for tpu_custom_call.1']
    #allocation5 [shape = 'u8[16384]{0}', space=vmem, size = 0x4000, scoped, tag = 'input window, operand 1, single buffered']
    #allocation6 [shape = 's32[1]{0}', space=sflag, size = 0x4, scoped, tag = 'scoped memory for tpu_custom_call.1']
    #allocation7 [shape = 'u8[16384]{0}', space=vmem, size = 0x4000, scoped, tag = 'input window, operand 2, single buffered']
    #allocation8 [shape = 'u8[8192]{0}', space=vmem, size = 0x2000, scoped, tag = 'output window, operand 0, single buffered']
    %8 = vsyncpa [#allocation3], 0
    %9 = vsyncpa [#allocation6], 0
    %10 = vsyncpa [#allocation4], 0
    // Predicated region
    $region2: #{tpu_custom_call.1} parent=1 // pred_check
      _
    $region3: #{tpu_custom_call.1} parent=1 // pred_check_branch
      %12 = sbr.rel (0) target = $region5
    $region4: #{tpu_custom_call.1} parent=1 // pred_region
      %s14 = ssub.s32 512, 256
      %15 = vsyncadd [#allocation3], %s14
      %s16 = sshll.u32 [#allocation2], 4
      %s17 = int_to_ptr.vmem [resolvable:$true] %s16
      %22 = dma.hbm_to_vmem [thread:$0]  %s0, 256, %s17, [#allocation3], 128, 128, 8
    $region5: #{tpu_custom_call.1} parent=1 // pred_fallthru
      _
    // Predicated region
    $region6: #{tpu_custom_call.1} parent=1 // pred_check
      _
    $region7: #{tpu_custom_call.1} parent=1 // pred_check_branch
      %24 = sbr.rel (0) target = $region9
    $region8: #{tpu_custom_call.1} parent=1 // pred_region
      %s26 = ssub.s32 512, 256
      %27 = vsyncadd [#allocation6], %s26
      %s28 = sshll.u32 [#allocation5], 4
      %s29 = int_to_ptr.vmem [resolvable:$true] %s28
      %34 = dma.hbm_to_vmem [thread:$0]  %s1, 256, %s29, [#allocation6], 128, 128, 8
    $region9: #{tpu_custom_call.1} parent=1 // pred_fallthru
      _
    // Predicated region
    $region10: #{tpu_custom_call.1} parent=1 // pred_check
      _
    $region11: #{tpu_custom_call.1} parent=1 // pred_check_branch
      %36 = sbr.rel (0) target = $region13
    $region12: #{tpu_custom_call.1} parent=1 // pred_region
      %s38 = ssub.s32 512, 256
      %39 = vsyncadd [#allocation6], %s38
      %s40 = sshll.u32 [#allocation7], 4
      %s41 = int_to_ptr.vmem [resolvable:$true] %s40
      %46 = dma.hbm_to_vmem [thread:$0]  %s2, 256, %s41, [#allocation6], 128, 128, 8
    $region13: #{tpu_custom_call.1} parent=1 // pred_fallthru
      _
    // Predicated region
    $region14: #{tpu_custom_call.1} parent=1 // pred_check
      _
    $region15: #{tpu_custom_call.1} parent=1 // pred_check_branch
      %48 = sbr.rel (0) target = $region17
    $region16: #{tpu_custom_call.1} parent=1 // pred_region
      %49 = dma.done [#allocation3], 512
    $region17: #{tpu_custom_call.1} parent=1 // pred_fallthru
      _
    // Predicated region
    $region18: #{tpu_custom_call.1} parent=1 // pred_check
      _
    $region19: #{tpu_custom_call.1} parent=1 // pred_check_branch
      %51 = sbr.rel (0) target = $region21
    $region20: #{tpu_custom_call.1} parent=1 // pred_region
      %52 = dma.done [#allocation6], 512
    $region21: #{tpu_custom_call.1} parent=1 // pred_fallthru
      _
    // Predicated region
    $region22: #{tpu_custom_call.1} parent=1 // pred_check
      _
    $region23: #{tpu_custom_call.1} parent=1 // pred_check_branch
      %54 = sbr.rel (0) target = $region25
    $region24: #{tpu_custom_call.1} parent=1 // pred_region
      %55 = dma.done [#allocation6], 512
    $region25: #{tpu_custom_call.1} parent=1 // pred_fallthru
      _
    %p56 = scmp.eq.s32.totalorder 0, 0
    // Predicated region
    $region26: #{tpu_custom_call.1} parent=1 // pred_check
      %p57 = pneg %p56
    $region27: #{tpu_custom_call.1} parent=1 // pred_check_branch
      %59 = sbr.rel (%p57) target = $region29
    $region28: #{tpu_custom_call.1} parent=1 // pred_region
      %60 = vst [vmem:[#allocation8] sm:$0xff] 0.0
      %61 = vst [vmem:[#allocation8 + $0x8] sm:$0xff] 0.0
    $region29: #{tpu_custom_call.1} parent=1 // pred_fallthru
      _
    %p62 = scmp.ne.s32.totalorder 0, 0
    // Predicated region
    $region30: #{tpu_custom_call.1} parent=1 // pred_check
      %p63 = pneg %p62
    $region31: #{tpu_custom_call.1} parent=1 // pred_check_branch
      %65 = sbr.rel (%p63) target = $region33
    $region32: #{tpu_custom_call.1} parent=1 // pred_region
      %v66 = vld [vmem:[#allocation2] sm:$0xff]
      %v67 = vld [vmem:[#allocation2 + $0x8] sm:$0xff]
      %v68 = vld [vmem:[#allocation2 + $0x10] sm:$0xff]
      %v69 = vld [vmem:[#allocation2 + $0x18] sm:$0xff]
      %v70 = vld [vmem:[#allocation5] sm:$0xff]
      %v71 = vld [vmem:[#allocation5 + $0x8] sm:$0xff]
      %v72 = vld [vmem:[#allocation5 + $0x10] sm:$0xff]
      %v73 = vld [vmem:[#allocation5 + $0x18] sm:$0xff]
      %v74 = vld [vmem:[#allocation7] sm:$0xff]
      %v75 = vld [vmem:[#allocation7 + $0x8] sm:$0xff]
      %v76 = vld [vmem:[#allocation7 + $0x10] sm:$0xff]
      %v77 = vld [vmem:[#allocation7 + $0x18] sm:$0xff]
      %v78 = vsub.f32 %v66, %v74
      %v79 = vsub.f32 %v67, %v75
      %v80 = vsub.f32 %v68, %v76
      %v81 = vsub.f32 %v69, %v77
      %v82 = vmul.f32 %v78, %v78
      %v83 = vmul.f32 %v79, %v79
      %v84 = vmul.f32 %v80, %v80
      %v85 = vmul.f32 %v81, %v81
      %v86 = vmul.f32 %v82, %v70
      %v87 = vmul.f32 %v83, %v71
      %v88 = vmul.f32 %v84, %v72
      %v89 = vmul.f32 %v85, %v73
      %v90 = vld [vmem:[#allocation8] sm:$0xff]
      %v91 = vadd.f32 %v86, %v87
      %v92 = vadd.f32 %v91, %v88
      %v93 = vadd.f32 %v92, %v89
      %v94 = vadd.f32 %v90, %v93
      %95 = vst [vmem:[#allocation8] sm:$0xff] %v94
      %v96 = vld [vmem:[#allocation8 + $0x8] sm:$0xff]
      %v97 = vadd.f32 %v70, %v71
      %v98 = vadd.f32 %v97, %v72
      %v99 = vadd.f32 %v98, %v73
      %v100 = vadd.f32 %v96, %v99
      %101 = vst [vmem:[#allocation8 + $0x8] sm:$0xff] %v100
    $region33: #{tpu_custom_call.1} parent=1 // pred_fallthru
      _
    // Predicated region
    $region34: #{tpu_custom_call.1} parent=1 // pred_check
      %p102 = pneg %p56
    $region35: #{tpu_custom_call.1} parent=1 // pred_check_branch
      %104 = sbr.rel (%p102) target = $region37
    $region36: #{tpu_custom_call.1} parent=1 // pred_region
      %v105 = vld [vmem:[#allocation2] sm:$0xff]
      %v106 = vld [vmem:[#allocation2 + $0x8] sm:$0xff]
      %v107 = vld [vmem:[#allocation2 + $0x10] sm:$0xff]
      %v108 = vld [vmem:[#allocation2 + $0x18] sm:$0xff]
      %v109 = vld [vmem:[#allocation5] sm:$0xff]
      %v110 = vld [vmem:[#allocation5 + $0x8] sm:$0xff]
      %v111 = vld [vmem:[#allocation5 + $0x10] sm:$0xff]
      %v112 = vld [vmem:[#allocation5 + $0x18] sm:$0xff]
      %v113 = vld [vmem:[#allocation7] sm:$0xff]
      %v114 = vld [vmem:[#allocation7 + $0x8] sm:$0xff]
      %v115 = vld [vmem:[#allocation7 + $0x10] sm:$0xff]
      %v116 = vld [vmem:[#allocation7 + $0x18] sm:$0xff]
      %s117 = smul.u32 0, 32
      %v118 = vsub.f32 %v105, %v113
      %v119 = vsub.f32 %v106, %v114
      %v120 = vsub.f32 %v107, %v115
      %v121 = vsub.f32 %v108, %v116
      %v122 = vmul.f32 %v118, %v118
      %v123 = vmul.f32 %v119, %v119
      %v124 = vmul.f32 %v120, %v120
      %v125 = vmul.f32 %v121, %v121
      %v126 = vmul.f32 %v122, %v109
      %v127 = vmul.f32 %v123, %v110
      %v128 = vmul.f32 %v124, %v111
      %v129 = vmul.f32 %v125, %v112
      %v130 = vlaneseq
      %v131 = vshrl.u32 %v130, 7
      %v132 = vadd.s32 %v131, 8
      %v133 = vadd.s32 %v131, 16
      %v134 = vadd.s32 %v131, 24
      %v135 = vstv %s117
      %v136 = vadd.s32 %v131, %v135
      %v137 = vadd.s32 %v132, %v135
      %v138 = vadd.s32 %v133, %v135
      %v139 = vadd.s32 %v134, %v135
      %vm140 = vcmp.lt.s32.totalorder %v136, 16
      %vm141 = vcmp.lt.s32.totalorder %v137, 16
      %vm142 = vcmp.lt.s32.totalorder %v138, 16
      %vm143 = vcmp.lt.s32.totalorder %v139, 16
      %v144 = vsel %vm140, %v126, 0.0
      %v145 = vsel %vm141, %v127, 0.0
      %v146 = vsel %vm142, %v128, 0.0
      %v147 = vsel %vm143, %v129, 0.0
      %v148 = vsel %vm140, %v109, 0.0
      %v149 = vsel %vm141, %v110, 0.0
      %v150 = vsel %vm142, %v111, 0.0
      %v151 = vsel %vm143, %v112, 0.0
      %v152 = vld [vmem:[#allocation8] sm:$0xff]
      %v153 = vadd.f32 %v144, %v145
      %v154 = vadd.f32 %v153, %v146
      %v155 = vadd.f32 %v154, %v147
      %v156 = vadd.f32 %v152, %v155
      %157 = vst [vmem:[#allocation8] sm:$0xff] %v156
      %v158 = vld [vmem:[#allocation8 + $0x8] sm:$0xff]
      %v159 = vadd.f32 %v148, %v149
      %v160 = vadd.f32 %v159, %v150
      %v161 = vadd.f32 %v160, %v151
      %v162 = vadd.f32 %v158, %v161
      %163 = vst [vmem:[#allocation8 + $0x8] sm:$0xff] %v162
    $region37: #{tpu_custom_call.1} parent=1 // pred_fallthru
      _
    // Predicated region
    $region38: #{tpu_custom_call.1} parent=1 // pred_check
      _
    $region39: #{tpu_custom_call.1} parent=1 // pred_check_branch
      %165 = sbr.rel (0) target = $region41
    $region40: #{tpu_custom_call.1} parent=1 // pred_region
      %s167 = ssub.s32 256, 256
      %168 = vsyncadd [#allocation4], %s167
      %s169 = sshll.u32 [#allocation8], 4
      %s170 = int_to_ptr.vmem [resolvable:$true] %s169
      %175 = dma.vmem_to_hbm [thread:$0]  %s170, 256, %s3, [#allocation4], 128, 128, 8
    $region41: #{tpu_custom_call.1} parent=1 // pred_fallthru
      _
    // Predicated region
    $region42: #{tpu_custom_call.1} parent=1 // pred_check
      _
    $region43: #{tpu_custom_call.1} parent=1 // pred_check_branch
      %177 = sbr.rel (0) target = $region45
    $region44: #{tpu_custom_call.1} parent=1 // pred_region
      %178 = dma.done [#allocation4], 256
    $region45: #{tpu_custom_call.1} parent=1 // pred_fallthru
      _
    %179 = vsyncpa [#allocation3], 1
    %180 = vsyncpa [#allocation6], 1
    %181 = vsyncpa [#allocation4], 1

</llo_original>
